<compile_context>
chip_gen: v6e
topology: v6e:2x2x1
jax: 0.10.0
libtpu: 0.0.40
codegen_flags: <defaults>
</compile_context>

<pallas_src>
import functools

import jax
import jax.numpy as jnp
from jax import lax
from jax.experimental import pallas as pl
from jax.experimental.pallas import tpu as pltpu


def get_padding(kernel_size, dilation):
    return (kernel_size * dilation - dilation) // 2


def _leaky_relu(v, slope=0.2):
    return jnp.where(v >= 0, v, slope * v)


def mdc_kernel(x_ref, wb_ref, bb_ref, wp_ref, bp_ref, sel_ref,
               o_ref, xpad_ref, spad_ref, *,
               offsets, max_pad, post_pad, T, C_in, n_branch):
    """One batch-group per grid step.

    x_ref    : (BT, C_in, T)                 un-padded input block
    wb_ref   : (n*C_out, K)      bf16        all branch taps packed (offset-deduped)
    bb_ref   : (n*C_out, 1)      f32         stacked branch biases
    wp_ref   : (C_out, 3*C_out)  bf16        post-conv taps packed
    bp_ref   : (C_out, 1)        f32         post-conv bias
    sel_ref  : (N1, L_store)     bf16        constant 0/1 decimation matrix
    o_ref    : (BT, C_out, L_store) f32      lane-dense output (L_store % 128 == 0)
    xpad_ref : (C_in_pad, BT*Tp)  f32 scratch  zero-padded (time + channel) input
    spad_ref : (C_out, BT*Wseg)   f32 scratch  zero-padded branch sum
    """
    BT = x_ref.shape[0]
    C_out = o_ref.shape[1]
    L_store = o_ref.shape[2]
    Tp = xpad_ref.shape[1] // BT
    Wseg = spad_ref.shape[1] // BT
    N1 = sel_ref.shape[0]

    # --- one-time zeroing of the padding scratches ----------------------------
    # Pad regions are never written afterwards; valid data regions are fully
    # overwritten every step, so this does not need to be repeated per step.
    @pl.when(pl.program_id(0) == 0)
    def _():
        xpad_ref[...] = jnp.zeros_like(xpad_ref)
        spad_ref[...] = jnp.zeros_like(spad_ref)

    # --- stage x (valid region only) into the padded scratch ------------------
    for b in range(BT):
        xpad_ref[0:C_in, b * Tp + max_pad: b * Tp + max_pad + T] = x_ref[b]

    # --- fused, offset-deduped im2col slab for ALL branch taps (bf16) ---------
    rows = []
    for off in offsets:
        pieces = [xpad_ref[:, b * Tp + off: b * Tp + off + T].astype(jnp.bfloat16)
                  for b in range(BT)]
        rows.append(jnp.concatenate(pieces, axis=1) if BT > 1 else pieces[0])
    slab = jnp.concatenate(rows, axis=0)                      # (K, BT*T) bf16

    # One MXU pass for every tap of every branch: (n*C_out, K) @ (K, BT*T).
    acc = jnp.dot(wb_ref[...], slab, preferred_element_type=jnp.float32)
    acc = _leaky_relu(acc + bb_ref[...])                      # bias + leaky_relu (f32)

    # Sum over branches (== cat(..., -1) then sum(-1) in the reference).
    s = acc[0:C_out]
    for i in range(1, n_branch):
        s = s + acc[i * C_out:(i + 1) * C_out]                # (C_out, BT*T)

    # --- post conv: stage the padded branch sum (valid region only) -----------
    for b in range(BT):
        spad_ref[:, b * Wseg + post_pad: b * Wseg + post_pad + T] = \
            s[:, b * T:(b + 1) * T]

    # Stride-1 post conv over exactly N1 = T + 2*post_pad - 2 columns per batch.
    taps = []
    for t in range(3):
        pieces = [spad_ref[:, b * Wseg + t: b * Wseg + t + N1].astype(jnp.bfloat16)
                  for b in range(BT)]
        taps.append(jnp.concatenate(pieces, axis=1) if BT > 1 else pieces[0])
    p = jnp.concatenate(taps, axis=0)                         # (3*C_out, BT*N1) bf16
    z1 = jnp.dot(wp_ref[...], p, preferred_element_type=jnp.float32)

    # Exact strided subsample with the constant 0/1 bf16 matrix:
    # z[:, j] = z1[:, strides*j]; columns j >= L_out select nothing (trimmed later).
    sel = sel_ref[...]
    for b in range(BT):
        z = jnp.dot(z1[:, b * N1:(b + 1) * N1].astype(jnp.bfloat16), sel,
                    preferred_element_type=jnp.float32)       # (C_out, L_store)
        o_ref[b] = _leaky_relu(z + bp_ref[...])               # lane-dense store


def mdc_forward(x, params, kernel_size, dilations, strides, batch_per_step=None):
    B, C_in, T = x.shape
    C_out = params["post_w"].shape[0]
    n_branch = len(kernel_size)
    assert C_out % 8 == 0, "packed-weight layout assumes C_out is a sublane multiple"

    if batch_per_step is None:
        batch_per_step = B          # fold all of B into one wide dot (1-TC chips)
    assert B % batch_per_step == 0
    BT = batch_per_step
    n_steps = B // BT

    pads = [get_padding(k, d) for k, d in zip(kernel_size, dilations)]
    max_pad = max(pads)
    # NOTE: the PyTorch module uses the *last* (_k, _d) of the loop for the
    # post_conv padding -- reproduced here on purpose.
    post_pad = get_padding(kernel_size[-1], dilations[-1])

    L_out = (T + 2 * post_pad - 3) // strides + 1     # true strided output length
    L_store = ((L_out + 127) // 128) * 128            # lane-dense store width
    N1 = T + 2 * post_pad - 2                         # stride-1 columns actually needed
    Wseg = T + 2 * post_pad                           # padded branch-sum width / batch

    C_in_pad = ((C_in + 7) // 8) * 8                  # f32 sublane multiple

    # ---- dedupe taps sharing the same input lane offset across branches ------
    tap_off = []
    for k, d, p in zip(kernel_size, dilations, pads):
        tap_off += [max_pad - p + t * d for t in range(k)]
    offsets = tuple(sorted(set(tap_off)))
    group = {o: g for g, o in enumerate(offsets)}
    K = len(offsets) * C_in_pad
    Tp = T + max(offsets)                             # padded-x scratch width / batch

    # ---- pack every tap of every branch into one (n*C_out, K) block matrix ---
    wb = jnp.zeros((n_branch * C_out, K), jnp.float32)
    for i, (k, d, p) in enumerate(zip(kernel_size, dilations, pads)):
        w = params["branch_w"][i]                     # (C_out, C_in, k)
        for t in range(k):
            g = group[max_pad - p + t * d]
            wb = wb.at[i * C_out:(i + 1) * C_out,
                       g * C_in_pad: g * C_in_pad + C_in].add(w[:, :, t])
    wb = wb.astype(jnp.bfloat16)                                   # (n*C_out, K)
    bb = jnp.concatenate(params["branch_b"], axis=0)               # (n*C_out, 1)

    wp = jnp.concatenate([params["post_w"][:, :, t] for t in range(3)],
                         axis=1).astype(jnp.bfloat16)              # (C_out, 3*C_out)
    bp = params["post_b"]                                          # (C_out, 1)

    # Constant 0/1 decimation matrix (exact in bf16), built ONCE here.
    sel = (jnp.arange(N1)[:, None] == strides * jnp.arange(L_store)[None, :]
           ).astype(jnp.bfloat16)                                  # (N1, L_store)

    kernel = functools.partial(
        mdc_kernel, offsets=offsets, max_pad=max_pad, post_pad=post_pad,
        T=T, C_in=C_in, n_branch=n_branch)

    out_full = pl.pallas_call(
        kernel,
        out_shape=jax.ShapeDtypeStruct((B, C_out, L_store), jnp.float32),
        grid=(n_steps,),
        in_specs=[
            pl.BlockSpec((BT, C_in, T), lambda g: (g, 0, 0)),          # x
            pl.BlockSpec((n_branch * C_out, K), lambda g: (0, 0)),     # packed branch W
            pl.BlockSpec((n_branch * C_out, 1), lambda g: (0, 0)),     # packed branch b
            pl.BlockSpec((C_out, 3 * C_out), lambda g: (0, 0)),        # packed post W
            pl.BlockSpec((C_out, 1), lambda g: (0, 0)),                # post b
            pl.BlockSpec((N1, L_store), lambda g: (0, 0)),             # decimation sel
        ],
        out_specs=pl.BlockSpec((BT, C_out, L_store), lambda g: (g, 0, 0)),
        scratch_shapes=[pltpu.VMEM((C_in_pad, BT * Tp), jnp.float32),
                        pltpu.VMEM((C_out, BT * Wseg), jnp.float32)],
        compiler_params=pltpu.CompilerParams(
            # "arbitrary": the one-time scratch zero-init under pl.when is then
            # valid for any grid size (serial loop on one core).
            dimension_semantics=("arbitrary",)),
    )(x, wb, bb, wp, bp, sel)

    # Contiguous (non-strided) final trim of the lane-dense padded output.
    return out_full[:, :, :L_out]


def mdc_reference(x, params, kernel_size, dilations, strides):
    """Plain-JAX reference (lax.conv) mirroring the PyTorch forward (f32)."""
    outs = None
    for i, (k, d) in enumerate(zip(kernel_size, dilations)):
        pad = get_padding(k, d)
        y = lax.conv_general_dilated(
            x, params["branch_w"][i], window_strides=(1,),
            padding=[(pad, pad)], rhs_dilation=(d,),
            dimension_numbers=("NCH", "OIH", "NCH"))
        y = y + params["branch_b"][i][None, :, :]
        y = _leaky_relu(y)
        outs = y if outs is None else outs + y
    pp = get_padding(kernel_size[-1], dilations[-1])
    z = lax.conv_general_dilated(
        outs, params["post_w"], window_strides=(strides,),
        padding=[(pp, pp)],
        dimension_numbers=("NCH", "OIH", "NCH"))
    z = z + params["post_b"][None, :, :]
    return _leaky_relu(z)


if __name__ == "__main__":
    B, C_in, C_out, T = 2, 4, 8, 128
    kernel_size = [3, 5, 7]
    dilations = [1, 2, 3]
    strides = 2

    key = jax.random.PRNGKey(0)
    keys = jax.random.split(key, 2 * len(kernel_size) + 3)

    branch_w, branch_b = [], []
    ki = 0
    for k in kernel_size:
        branch_w.append(0.1 * jax.random.normal(keys[ki], (C_out, C_in, k), jnp.float32)); ki += 1
        branch_b.append(0.1 * jax.random.normal(keys[ki], (C_out, 1), jnp.float32)); ki += 1
    post_w = 0.1 * jax.random.normal(keys[ki], (C_out, C_out, 3), jnp.float32); ki += 1
    post_b = 0.1 * jax.random.normal(keys[ki], (C_out, 1), jnp.float32); ki += 1
    x = jax.random.normal(keys[ki], (B, C_in, T), jnp.float32)

    params = {"branch_w": branch_w, "branch_b": branch_b,
              "post_w": post_w, "post_b": post_b}

    out = mdc_forward(x, params, kernel_size, dilations, strides)
    out = jax.block_until_ready(out)

    ref = mdc_reference(x, params, kernel_size, dilations, strides)
    assert out.shape == ref.shape, (out.shape, ref.shape)
    max_err = float(jnp.max(jnp.abs(out - ref)))
    # bf16 MXU operands (f32 accumulation) -> looser tolerance vs the f32 reference.
    assert jnp.allclose(out, ref, atol=3e-2, rtol=3e-2), max_err

    print("KERNEL_OK")
</pallas_src>

<mosaic_0001>
module attributes {stable_mosaic.version = 11 : i64} {
  func.func @mdc_kernel(%arg0: i32, %arg1: memref<2x4x128xf32, #tpu.memory_space<vmem>>, %arg2: memref<24x104xbf16, #tpu.memory_space<vmem>>, %arg3: memref<24x1xf32, #tpu.memory_space<vmem>>, %arg4: memref<8x24xbf16, #tpu.memory_space<vmem>>, %arg5: memref<8x1xf32, #tpu.memory_space<vmem>>, %arg6: memref<144x128xbf16, #tpu.memory_space<vmem>>, %arg7: memref<2x8x128xf32, #tpu.memory_space<vmem>>, %arg8: memref<8x292xf32, #tpu.memory_space<vmem>>, %arg9: memref<8x292xf32, #tpu.memory_space<vmem>>) attributes {dimension_semantics = [#tpu.dimension_semantics<arbitrary>], iteration_bounds = array<i64: 1>, scalar_prefetch = 0 : i64, scratch_operands = 2 : i64, tpu.core_type = #tpu.core_type<tc>, window_params = [{transform_indices = @transform_0, window_bounds = array<i64: 2, 4, 128>}, {pipeline_mode = #tpu.pipeline_mode<synchronous>, transform_indices = @transform_1, window_bounds = array<i64: 24, 104>}, {pipeline_mode = #tpu.pipeline_mode<synchronous>, transform_indices = @transform_2, window_bounds = array<i64: 24, 1>}, {pipeline_mode = #tpu.pipeline_mode<synchronous>, transform_indices = @transform_3, window_bounds = array<i64: 8, 24>}, {pipeline_mode = #tpu.pipeline_mode<synchronous>, transform_indices = @transform_4, window_bounds = array<i64: 8, 1>}, {pipeline_mode = #tpu.pipeline_mode<synchronous>, transform_indices = @transform_5, window_bounds = array<i64: 144, 128>}, {transform_indices = @transform_6, window_bounds = array<i64: 2, 8, 128>}]} {
    %c0_i32 = arith.constant 0 : i32
    %0 = arith.cmpi eq, %arg0, %c0_i32 : i32
    %1 = arith.extui %0 : i1 to i32
    %c0_i32_0 = arith.constant 0 : i32
    %2 = arith.cmpi ne, %1, %c0_i32_0 : i32
    scf.if %2 {
      %cst_76 = arith.constant 0.000000e+00 : f32
      %141 = vector.broadcast %cst_76 : f32 to vector<8x292xf32>
      %c0_77 = arith.constant 0 : index
      %c0_78 = arith.constant 0 : index
      %142 = vector.load %arg8[%c0_77, %c0_78] : memref<8x292xf32, #tpu.memory_space<vmem>>, vector<8x292xf32>
      tpu.vector_store %arg8[%c0_77, %c0_78], %141 {strides = array<i32>} : memref<8x292xf32, #tpu.memory_space<vmem>>, vector<8x292xf32>,
      %cst_79 = arith.constant 0.000000e+00 : f32
      %143 = vector.broadcast %cst_79 : f32 to vector<8x292xf32>
      %c0_80 = arith.constant 0 : index
      %c0_81 = arith.constant 0 : index
      %144 = vector.load %arg9[%c0_80, %c0_81] : memref<8x292xf32, #tpu.memory_space<vmem>>, vector<8x292xf32>
      tpu.vector_store %arg9[%c0_80, %c0_81], %143 {strides = array<i32>} : memref<8x292xf32, #tpu.memory_space<vmem>>, vector<8x292xf32>,
    } else {
    }
    %c0 = arith.constant 0 : index
    %c0_1 = arith.constant 0 : index
    %c0_2 = arith.constant 0 : index
    %3 = vector.load %arg1[%c0, %c0_1, %c0_2] : memref<2x4x128xf32, #tpu.memory_space<vmem>>, vector<1x4x128xf32>
    %4 = vector.shape_cast %3 : vector<1x4x128xf32> to vector<4x128xf32>
    %c0_3 = arith.constant 0 : index
    %c9 = arith.constant 9 : index
    %5 = vector.load %arg8[%c0_3, %c9] : memref<8x292xf32, #tpu.memory_space<vmem>>, vector<4x128xf32>
    tpu.vector_store %arg8[%c0_3, %c9], %4 {strides = array<i32>} : memref<8x292xf32, #tpu.memory_space<vmem>>, vector<4x128xf32>,
    %c1 = arith.constant 1 : index
    %c0_4 = arith.constant 0 : index
    %c0_5 = arith.constant 0 : index
    %6 = vector.load %arg1[%c1, %c0_4, %c0_5] : memref<2x4x128xf32, #tpu.memory_space<vmem>>, vector<1x4x128xf32>
    %7 = vector.shape_cast %6 : vector<1x4x128xf32> to vector<4x128xf32>
    %c0_6 = arith.constant 0 : index
    %c155 = arith.constant 155 : index
    %8 = vector.load %arg8[%c0_6, %c155] : memref<8x292xf32, #tpu.memory_space<vmem>>, vector<4x128xf32>
    tpu.vector_store %arg8[%c0_6, %c155], %7 {strides = array<i32>} : memref<8x292xf32, #tpu.memory_space<vmem>>, vector<4x128xf32>,
    %c0_7 = arith.constant 0 : index
    %c0_8 = arith.constant 0 : index
    %9 = vector.load %arg8[%c0_7, %c0_8] : memref<8x292xf32, #tpu.memory_space<vmem>>, vector<8x128xf32>
    %10 = arith.truncf %9 : vector<8x128xf32> to vector<8x128xbf16>
    %c0_9 = arith.constant 0 : index
    %c146 = arith.constant 146 : index
    %11 = vector.load %arg8[%c0_9, %c146] : memref<8x292xf32, #tpu.memory_space<vmem>>, vector<8x128xf32>
    %12 = arith.truncf %11 : vector<8x128xf32> to vector<8x128xbf16>
    %13 = tpu.concatenate %10, %12 in 1 : vector<8x128xbf16>, vector<8x128xbf16> -> vector<8x256xbf16>
    %c0_10 = arith.constant 0 : index
    %c3 = arith.constant 3 : index
    %14 = vector.load %arg8[%c0_10, %c3] : memref<8x292xf32, #tpu.memory_space<vmem>>, vector<8x128xf32>
    %15 = arith.truncf %14 : vector<8x128xf32> to vector<8x128xbf16>
    %c0_11 = arith.constant 0 : index
    %c149 = arith.constant 149 : index
    %16 = vector.load %arg8[%c0_11, %c149] : memref<8x292xf32, #tpu.memory_space<vmem>>, vector<8x128xf32>
    %17 = arith.truncf %16 : vector<8x128xf32> to vector<8x128xbf16>
    %18 = tpu.concatenate %15, %17 in 1 : vector<8x128xbf16>, vector<8x128xbf16> -> vector<8x256xbf16>
    %c0_12 = arith.constant 0 : index
    %c5 = arith.constant 5 : index
    %19 = vector.load %arg8[%c0_12, %c5] : memref<8x292xf32, #tpu.memory_space<vmem>>, vector<8x128xf32>
    %20 = arith.truncf %19 : vector<8x128xf32> to vector<8x128xbf16>
    %c0_13 = arith.constant 0 : index
    %c151 = arith.constant 151 : index
    %21 = vector.load %arg8[%c0_13, %c151] : memref<8x292xf32, #tpu.memory_space<vmem>>, vector<8x128xf32>
    %22 = arith.truncf %21 : vector<8x128xf32> to vector<8x128xbf16>
    %23 = tpu.concatenate %20, %22 in 1 : vector<8x128xbf16>, vector<8x128xbf16> -> vector<8x256xbf16>
    %c0_14 = arith.constant 0 : index
    %c6 = arith.constant 6 : index
    %24 = vector.load %arg8[%c0_14, %c6] : memref<8x292xf32, #tpu.memory_space<vmem>>, vector<8x128xf32>
    %25 = arith.truncf %24 : vector<8x128xf32> to vector<8x128xbf16>
    %c0_15 = arith.constant 0 : index
    %c152 = arith.constant 152 : index
    %26 = vector.load %arg8[%c0_15, %c152] : memref<8x292xf32, #tpu.memory_space<vmem>>, vector<8x128xf32>
    %27 = arith.truncf %26 : vector<8x128xf32> to vector<8x128xbf16>
    %28 = tpu.concatenate %25, %27 in 1 : vector<8x128xbf16>, vector<8x128xbf16> -> vector<8x256xbf16>
    %c0_16 = arith.constant 0 : index
    %c7 = arith.constant 7 : index
    %29 = vector.load %arg8[%c0_16, %c7] : memref<8x292xf32, #tpu.memory_space<vmem>>, vector<8x128xf32>
    %30 = arith.truncf %29 : vector<8x128xf32> to vector<8x128xbf16>
    %c0_17 = arith.constant 0 : index
    %c153 = arith.constant 153 : index
    %31 = vector.load %arg8[%c0_17, %c153] : memref<8x292xf32, #tpu.memory_space<vmem>>, vector<8x128xf32>
    %32 = arith.truncf %31 : vector<8x128xf32> to vector<8x128xbf16>
    %33 = tpu.concatenate %30, %32 in 1 : vector<8x128xbf16>, vector<8x128xbf16> -> vector<8x256xbf16>
    %c0_18 = arith.constant 0 : index
    %c8 = arith.constant 8 : index
    %34 = vector.load %arg8[%c0_18, %c8] : memref<8x292xf32, #tpu.memory_space<vmem>>, vector<8x128xf32>
    %35 = arith.truncf %34 : vector<8x128xf32> to vector<8x128xbf16>
    %c0_19 = arith.constant 0 : index
    %c154 = arith.constant 154 : index
    %36 = vector.load %arg8[%c0_19, %c154] : memref<8x292xf32, #tpu.memory_space<vmem>>, vector<8x128xf32>
    %37 = arith.truncf %36 : vector<8x128xf32> to vector<8x128xbf16>
    %38 = tpu.concatenate %35, %37 in 1 : vector<8x128xbf16>, vector<8x128xbf16> -> vector<8x256xbf16>
    %c0_20 = arith.constant 0 : index
    %c9_21 = arith.constant 9 : index
    %39 = vector.load %arg8[%c0_20, %c9_21] : memref<8x292xf32, #tpu.memory_space<vmem>>, vector<8x128xf32>
    %40 = arith.truncf %39 : vector<8x128xf32> to vector<8x128xbf16>
    %c0_22 = arith.constant 0 : index
    %c155_23 = arith.constant 155 : index
    %41 = vector.load %arg8[%c0_22, %c155_23] : memref<8x292xf32, #tpu.memory_space<vmem>>, vector<8x128xf32>
    %42 = arith.truncf %41 : vector<8x128xf32> to vector<8x128xbf16>
    %43 = tpu.concatenate %40, %42 in 1 : vector<8x128xbf16>, vector<8x128xbf16> -> vector<8x256xbf16>
    %c0_24 = arith.constant 0 : index
    %c10 = arith.constant 10 : index
    %44 = vector.load %arg8[%c0_24, %c10] : memref<8x292xf32, #tpu.memory_space<vmem>>, vector<8x128xf32>
    %45 = arith.truncf %44 : vector<8x128xf32> to vector<8x128xbf16>
    %c0_25 = arith.constant 0 : index
    %c156 = arith.constant 156 : index
    %46 = vector.load %arg8[%c0_25, %c156] : memref<8x292xf32, #tpu.memory_space<vmem>>, vector<8x128xf32>
    %47 = arith.truncf %46 : vector<8x128xf32> to vector<8x128xbf16>
    %48 = tpu.concatenate %45, %47 in 1 : vector<8x128xbf16>, vector<8x128xbf16> -> vector<8x256xbf16>
    %c0_26 = arith.constant 0 : index
    %c11 = arith.constant 11 : index
    %49 = vector.load %arg8[%c0_26, %c11] : memref<8x292xf32, #tpu.memory_space<vmem>>, vector<8x128xf32>
    %50 = arith.truncf %49 : vector<8x128xf32> to vector<8x128xbf16>
    %c0_27 = arith.constant 0 : index
    %c157 = arith.constant 157 : index
    %51 = vector.load %arg8[%c0_27, %c157] : memref<8x292xf32, #tpu.memory_space<vmem>>, vector<8x128xf32>
    %52 = arith.truncf %51 : vector<8x128xf32> to vector<8x128xbf16>
    %53 = tpu.concatenate %50, %52 in 1 : vector<8x128xbf16>, vector<8x128xbf16> -> vector<8x256xbf16>
    %c0_28 = arith.constant 0 : index
    %c12 = arith.constant 12 : index
    %54 = vector.load %arg8[%c0_28, %c12] : memref<8x292xf32, #tpu.memory_space<vmem>>, vector<8x128xf32>
    %55 = arith.truncf %54 : vector<8x128xf32> to vector<8x128xbf16>
    %c0_29 = arith.constant 0 : index
    %c158 = arith.constant 158 : index
    %56 = vector.load %arg8[%c0_29, %c158] : memref<8x292xf32, #tpu.memory_space<vmem>>, vector<8x128xf32>
    %57 = arith.truncf %56 : vector<8x128xf32> to vector<8x128xbf16>
    %58 = tpu.concatenate %55, %57 in 1 : vector<8x128xbf16>, vector<8x128xbf16> -> vector<8x256xbf16>
    %c0_30 = arith.constant 0 : index
    %c13 = arith.constant 13 : index
    %59 = vector.load %arg8[%c0_30, %c13] : memref<8x292xf32, #tpu.memory_space<vmem>>, vector<8x128xf32>
    %60 = arith.truncf %59 : vector<8x128xf32> to vector<8x128xbf16>
    %c0_31 = arith.constant 0 : index
    %c159 = arith.constant 159 : index
    %61 = vector.load %arg8[%c0_31, %c159] : memref<8x292xf32, #tpu.memory_space<vmem>>, vector<8x128xf32>
    %62 = arith.truncf %61 : vector<8x128xf32> to vector<8x128xbf16>
    %63 = tpu.concatenate %60, %62 in 1 : vector<8x128xbf16>, vector<8x128xbf16> -> vector<8x256xbf16>
    %c0_32 = arith.constant 0 : index
    %c15 = arith.constant 15 : index
    %64 = vector.load %arg8[%c0_32, %c15] : memref<8x292xf32, #tpu.memory_space<vmem>>, vector<8x128xf32>
    %65 = arith.truncf %64 : vector<8x128xf32> to vector<8x128xbf16>
    %c0_33 = arith.constant 0 : index
    %c161 = arith.constant 161 : index
    %66 = vector.load %arg8[%c0_33, %c161] : memref<8x292xf32, #tpu.memory_space<vmem>>, vector<8x128xf32>
    %67 = arith.truncf %66 : vector<8x128xf32> to vector<8x128xbf16>
    %68 = tpu.concatenate %65, %67 in 1 : vector<8x128xbf16>, vector<8x128xbf16> -> vector<8x256xbf16>
    %c0_34 = arith.constant 0 : index
    %c18 = arith.constant 18 : index
    %69 = vector.load %arg8[%c0_34, %c18] : memref<8x292xf32, #tpu.memory_space<vmem>>, vector<8x128xf32>
    %70 = arith.truncf %69 : vector<8x128xf32> to vector<8x128xbf16>
    %c0_35 = arith.constant 0 : index
    %c164 = arith.constant 164 : index
    %71 = vector.load %arg8[%c0_35, %c164] : memref<8x292xf32, #tpu.memory_space<vmem>>, vector<8x128xf32>
    %72 = arith.truncf %71 : vector<8x128xf32> to vector<8x128xbf16>
    %73 = tpu.concatenate %70, %72 in 1 : vector<8x128xbf16>, vector<8x128xbf16> -> vector<8x256xbf16>
    %74 = tpu.concatenate %13, %18, %23, %28, %33, %38, %43, %48, %53, %58, %63, %68, %73 in 0 : vector<8x256xbf16>, vector<8x256xbf16>, vector<8x256xbf16>, vector<8x256xbf16>, vector<8x256xbf16>, vector<8x256xbf16>, vector<8x256xbf16>, vector<8x256xbf16>, vector<8x256xbf16>, vector<8x256xbf16>, vector<8x256xbf16>, vector<8x256xbf16>, vector<8x256xbf16> -> vector<104x256xbf16>
    %c0_36 = arith.constant 0 : index
    %c0_37 = arith.constant 0 : index
    %75 = vector.load %arg2[%c0_36, %c0_37] : memref<24x104xbf16, #tpu.memory_space<vmem>>, vector<24x104xbf16>
    %cst = arith.constant dense<0.000000e+00> : vector<24x256xf32>
    %76 = tpu.matmul %75, %74, %cst {dimension_numbers = #tpu.dot_dimension_numbers<[1], [0], [0], [1], [0, 0, 1, 1], [], []>} : vector<24x104xbf16>, vector<104x256xbf16>, vector<24x256xf32> -> vector<24x256xf32>
    %c0_38 = arith.constant 0 : index
    %c0_39 = arith.constant 0 : index
    %77 = vector.load %arg3[%c0_38, %c0_39] : memref<24x1xf32, #tpu.memory_space<vmem>>, vector<24x1xf32>
    %78 = vector.broadcast %77 : vector<24x1xf32> to vector<24x256xf32>
    %79 = arith.addf %76, %78 : vector<24x256xf32>
    %cst_40 = arith.constant 0.000000e+00 : f32
    %80 = vector.broadcast %cst_40 : f32 to vector<24x256xf32>
    %81 = arith.cmpf oge, %79, %80 : vector<24x256xf32>
    %cst_41 = arith.constant 2.000000e-01 : f32
    %82 = vector.broadcast %cst_41 : f32 to vector<24x256xf32>
    %83 = arith.mulf %82, %79 : vector<24x256xf32>
    %84 = arith.select %81, %79, %83 : vector<24x256xi1>, vector<24x256xf32>
    %85 = vector.extract_strided_slice %84 {offsets = [0, 0], sizes = [8, 256], strides = [1, 1]} : vector<24x256xf32> to vector<8x256xf32>
    %86 = vector.extract_strided_slice %84 {offsets = [8, 0], sizes = [8, 256], strides = [1, 1]} : vector<24x256xf32> to vector<8x256xf32>
    %87 = arith.addf %85, %86 : vector<8x256xf32>
    %88 = vector.extract_strided_slice %84 {offsets = [16, 0], sizes = [8, 256], strides = [1, 1]} : vector<24x256xf32> to vector<8x256xf32>
    %89 = arith.addf %87, %88 : vector<8x256xf32>
    %90 = vector.extract_strided_slice %89 {offsets = [0, 0], sizes = [8, 128], strides = [1, 1]} : vector<8x256xf32> to vector<8x128xf32>
    %c0_42 = arith.constant 0 : index
    %c9_43 = arith.constant 9 : index
    %91 = vector.load %arg9[%c0_42, %c9_43] : memref<8x292xf32, #tpu.memory_space<vmem>>, vector<8x128xf32>
    tpu.vector_store %arg9[%c0_42, %c9_43], %90 {strides = array<i32>} : memref<8x292xf32, #tpu.memory_space<vmem>>, vector<8x128xf32>,
    %92 = vector.extract_strided_slice %89 {offsets = [0, 128], sizes = [8, 128], strides = [1, 1]} : vector<8x256xf32> to vector<8x128xf32>
    %c0_44 = arith.constant 0 : index
    %c155_45 = arith.constant 155 : index
    %93 = vector.load %arg9[%c0_44, %c155_45] : memref<8x292xf32, #tpu.memory_space<vmem>>, vector<8x128xf32>
    tpu.vector_store %arg9[%c0_44, %c155_45], %92 {strides = array<i32>} : memref<8x292xf32, #tpu.memory_space<vmem>>, vector<8x128xf32>,
    %c0_46 = arith.constant 0 : index
    %c0_47 = arith.constant 0 : index
    %94 = vector.load %arg9[%c0_46, %c0_47] : memref<8x292xf32, #tpu.memory_space<vmem>>, vector<8x144xf32>
    %95 = arith.truncf %94 : vector<8x144xf32> to vector<8x144xbf16>
    %c0_48 = arith.constant 0 : index
    %c146_49 = arith.constant 146 : index
    %96 = vector.load %arg9[%c0_48, %c146_49] : memref<8x292xf32, #tpu.memory_space<vmem>>, vector<8x144xf32>
    %97 = arith.truncf %96 : vector<8x144xf32> to vector<8x144xbf16>
    %98 = tpu.concatenate %95, %97 in 1 : vector<8x144xbf16>, vector<8x144xbf16> -> vector<8x288xbf16>
    %c0_50 = arith.constant 0 : index
    %c1_51 = arith.constant 1 : index
    %99 = vector.load %arg9[%c0_50, %c1_51] : memref<8x292xf32, #tpu.memory_space<vmem>>, vector<8x144xf32>
    %100 = arith.truncf %99 : vector<8x144xf32> to vector<8x144xbf16>
    %c0_52 = arith.constant 0 : index
    %c147 = arith.constant 147 : index
    %101 = vector.load %arg9[%c0_52, %c147] : memref<8x292xf32, #tpu.memory_space<vmem>>, vector<8x144xf32>
    %102 = arith.truncf %101 : vector<8x144xf32> to vector<8x144xbf16>
    %103 = tpu.concatenate %100, %102 in 1 : vector<8x144xbf16>, vector<8x144xbf16> -> vector<8x288xbf16>
    %c0_53 = arith.constant 0 : index
    %c2 = arith.constant 2 : index
    %104 = vector.load %arg9[%c0_53, %c2] : memref<8x292xf32, #tpu.memory_space<vmem>>, vector<8x144xf32>
    %105 = arith.truncf %104 : vector<8x144xf32> to vector<8x144xbf16>
    %c0_54 = arith.constant 0 : index
    %c148 = arith.constant 148 : index
    %106 = vector.load %arg9[%c0_54, %c148] : memref<8x292xf32, #tpu.memory_space<vmem>>, vector<8x144xf32>
    %107 = arith.truncf %106 : vector<8x144xf32> to vector<8x144xbf16>
    %108 = tpu.concatenate %105, %107 in 1 : vector<8x144xbf16>, vector<8x144xbf16> -> vector<8x288xbf16>
    %109 = tpu.concatenate %98, %103, %108 in 0 : vector<8x288xbf16>, vector<8x288xbf16>, vector<8x288xbf16> -> vector<24x288xbf16>
    %c0_55 = arith.constant 0 : index
    %c0_56 = arith.constant 0 : index
    %110 = vector.load %arg4[%c0_55, %c0_56] : memref<8x24xbf16, #tpu.memory_space<vmem>>, vector<8x24xbf16>
    %cst_57 = arith.constant dense<0.000000e+00> : vector<8x288xf32>
    %111 = tpu.matmul %110, %109, %cst_57 {dimension_numbers = #tpu.dot_dimension_numbers<[1], [0], [0], [1], [0, 0, 1, 1], [], []>} : vector<8x24xbf16>, vector<24x288xbf16>, vector<8x288xf32> -> vector<8x288xf32>
    %c0_58 = arith.constant 0 : index
    %c0_59 = arith.constant 0 : index
    %112 = vector.load %arg6[%c0_58, %c0_59] : memref<144x128xbf16, #tpu.memory_space<vmem>>, vector<144x128xbf16>
    %113 = vector.extract_strided_slice %111 {offsets = [0, 0], sizes = [8, 144], strides = [1, 1]} : vector<8x288xf32> to vector<8x144xf32>
    %114 = arith.truncf %113 : vector<8x144xf32> to vector<8x144xbf16>
    %cst_60 = arith.constant dense<0.000000e+00> : vector<8x128xf32>
    %115 = tpu.matmul %114, %112, %cst_60 {dimension_numbers = #tpu.dot_dimension_numbers<[1], [0], [0], [1], [0, 0, 1, 1], [], []>} : vector<8x144xbf16>, vector<144x128xbf16>, vector<8x128xf32> -> vector<8x128xf32>
    %c0_61 = arith.constant 0 : index
    %c0_62 = arith.constant 0 : index
    %116 = vector.load %arg5[%c0_61, %c0_62] : memref<8x1xf32, #tpu.memory_space<vmem>>, vector<8x1xf32>
    %117 = vector.broadcast %116 : vector<8x1xf32> to vector<8x128xf32>
    %118 = arith.addf %115, %117 : vector<8x128xf32>
    %cst_63 = arith.constant 0.000000e+00 : f32
    %119 = vector.broadcast %cst_63 : f32 to vector<8x128xf32>
    %120 = arith.cmpf oge, %118, %119 : vector<8x128xf32>
    %cst_64 = arith.constant 2.000000e-01 : f32
    %121 = vector.broadcast %cst_64 : f32 to vector<8x128xf32>
    %122 = arith.mulf %121, %118 : vector<8x128xf32>
    %123 = arith.select %120, %118, %122 : vector<8x128xi1>, vector<8x128xf32>
    %c0_65 = arith.constant 0 : index
    %c0_66 = arith.constant 0 : index
    %c0_67 = arith.constant 0 : index
    %124 = vector.load %arg7[%c0_65, %c0_66, %c0_67] : memref<2x8x128xf32, #tpu.memory_space<vmem>>, vector<1x8x128xf32>
    %125 = vector.shape_cast %124 : vector<1x8x128xf32> to vector<8x128xf32>
    %126 = vector.shape_cast %123 : vector<8x128xf32> to vector<1x8x128xf32>
    tpu.vector_store %arg7[%c0_65, %c0_66, %c0_67], %126 {strides = array<i32>} : memref<2x8x128xf32, #tpu.memory_space<vmem>>, vector<1x8x128xf32>,
    %127 = vector.extract_strided_slice %111 {offsets = [0, 144], sizes = [8, 144], strides = [1, 1]} : vector<8x288xf32> to vector<8x144xf32>
    %128 = arith.truncf %127 : vector<8x144xf32> to vector<8x144xbf16>
    %cst_68 = arith.constant dense<0.000000e+00> : vector<8x128xf32>
    %129 = tpu.matmul %128, %112, %cst_68 {dimension_numbers = #tpu.dot_dimension_numbers<[1], [0], [0], [1], [0, 0, 1, 1], [], []>} : vector<8x144xbf16>, vector<144x128xbf16>, vector<8x128xf32> -> vector<8x128xf32>
    %c0_69 = arith.constant 0 : index
    %c0_70 = arith.constant 0 : index
    %130 = vector.load %arg5[%c0_69, %c0_70] : memref<8x1xf32, #tpu.memory_space<vmem>>, vector<8x1xf32>
    %131 = vector.broadcast %130 : vector<8x1xf32> to vector<8x128xf32>
    %132 = arith.addf %129, %131 : vector<8x128xf32>
    %cst_71 = arith.constant 0.000000e+00 : f32
    %133 = vector.broadcast %cst_71 : f32 to vector<8x128xf32>
    %134 = arith.cmpf oge, %132, %133 : vector<8x128xf32>
    %cst_72 = arith.constant 2.000000e-01 : f32
    %135 = vector.broadcast %cst_72 : f32 to vector<8x128xf32>
    %136 = arith.mulf %135, %132 : vector<8x128xf32>
    %137 = arith.select %134, %132, %136 : vector<8x128xi1>, vector<8x128xf32>
    %c1_73 = arith.constant 1 : index
    %c0_74 = arith.constant 0 : index
    %c0_75 = arith.constant 0 : index
    %138 = vector.load %arg7[%c1_73, %c0_74, %c0_75] : memref<2x8x128xf32, #tpu.memory_space<vmem>>, vector<1x8x128xf32>
    %139 = vector.shape_cast %138 : vector<1x8x128xf32> to vector<8x128xf32>
    %140 = vector.shape_cast %137 : vector<8x128xf32> to vector<1x8x128xf32>
    tpu.vector_store %arg7[%c1_73, %c0_74, %c0_75], %140 {strides = array<i32>} : memref<2x8x128xf32, #tpu.memory_space<vmem>>, vector<1x8x128xf32>,
    return
  }
  func.func @transform_0(%arg0: i32) -> (i32, i32, i32) {
    %c0_i32 = arith.constant 0 : i32
    %c0_i32_0 = arith.constant 0 : i32
    %c0_i32_1 = arith.constant 0 : i32
    return %arg0, %c0_i32, %c0_i32_0 : i32, i32, i32
  }
  func.func @transform_1(%arg0: i32) -> (i32, i32) {
    %c0_i32 = arith.constant 0 : i32
    %c0_i32_0 = arith.constant 0 : i32
    %c0_i32_1 = arith.constant 0 : i32
    return %c0_i32, %c0_i32_0 : i32, i32
  }
  func.func @transform_2(%arg0: i32) -> (i32, i32) {
    %c0_i32 = arith.constant 0 : i32
    %c0_i32_0 = arith.constant 0 : i32
    %c0_i32_1 = arith.constant 0 : i32
    return %c0_i32, %c0_i32_0 : i32, i32
  }
  func.func @transform_3(%arg0: i32) -> (i32, i32) {
    %c0_i32 = arith.constant 0 : i32
    %c0_i32_0 = arith.constant 0 : i32
    %c0_i32_1 = arith.constant 0 : i32
    return %c0_i32, %c0_i32_0 : i32, i32
  }
  func.func @transform_4(%arg0: i32) -> (i32, i32) {
    %c0_i32 = arith.constant 0 : i32
    %c0_i32_0 = arith.constant 0 : i32
    %c0_i32_1 = arith.constant 0 : i32
    return %c0_i32, %c0_i32_0 : i32, i32
  }
  func.func @transform_5(%arg0: i32) -> (i32, i32) {
    %c0_i32 = arith.constant 0 : i32
    %c0_i32_0 = arith.constant 0 : i32
    %c0_i32_1 = arith.constant 0 : i32
    return %c0_i32, %c0_i32_0 : i32, i32
  }
  func.func @transform_6(%arg0: i32) -> (i32, i32, i32) {
    %c0_i32 = arith.constant 0 : i32
    %c0_i32_0 = arith.constant 0 : i32
    %c0_i32_1 = arith.constant 0 : i32
    return %arg0, %c0_i32, %c0_i32_0 : i32, i32, i32
  }
}

</mosaic_0001>

<llo_original>
// kernel: tpu_custom_call.1
$region0: #{tpu_custom_call.1}
  #allocation0 [shape = 'u32[]', space=smem, size = 0x4, offset = 0x4, fixed_abs, tag = 'smem constant byte address 0x4 - core index']
  #allocation1 [shape = 'u32[144,128]{1,0:T(1,128)}', space=vmem, size = 0x12000, scoped, tag = 'internal scratch']
  #allocation2 [shape = 'f32[8,292]{1,0:T(8,128)}', space=vmem, size = 0x3000, scoped, tag = 'scratch operand']
  #allocation3 [shape = 'f32[8,292]{1,0:T(8,128)}', space=vmem, size = 0x3000, scoped, tag = 'scratch operand']
  %s0 = inlined_call_operand.vmem [shape: f32[2,4,128], index: 0, kind: input, shape index: {}]
  %s1 = inlined_call_operand.vmem [shape: bf16[24,104], index: 1, kind: input, shape index: {}]
  %s2 = inlined_call_operand.vmem [shape: f32[24,1], index: 2, kind: input, shape index: {}]
  %s3 = inlined_call_operand.vmem [shape: bf16[8,24], index: 3, kind: input, shape index: {}]
  %s4 = inlined_call_operand.vmem [shape: f32[8,1], index: 4, kind: input, shape index: {}]
  %s5 = inlined_call_operand.hbm [shape: bf16[144,128], index: 5, kind: input, shape index: {}]
  %s6 = inlined_call_operand.hbm [shape: f32[2,8,128], index: 6, kind: output, shape index: {}]
  %s7 = sld [smem:[#allocation0]]
  $region42: #{tpu_custom_call.1} parent=0
    _
  %s9 = ssub.s32 1, %s7
  %s10 = scalar_select 0, %s9, %s7
  $region1: #{tpu_custom_call.1} parent=0
    #allocation4 [shape = 'u8[36864]{0}', space=vmem, size = 0x9000, scoped, tag = 'input window, operand 5, single buffered']
    #allocation5 [shape = 's32[1]{0}', space=sflag, size = 0x4, scoped, tag = 'scoped memory for tpu_custom_call.1']
    #allocation6 [shape = 's32[1]{0}', space=sflag, size = 0x4, scoped, tag = 'scoped memory for tpu_custom_call.1']
    #allocation7 [shape = 'u8[8192]{0}', space=vmem, size = 0x2000, scoped, tag = 'output window, operand 0, single buffered']
    %11 = vsyncpa [#allocation5], 0
    %12 = vsyncpa [#allocation6], 0
    // Predicated region
    $region2: #{tpu_custom_call.1} parent=1 // pred_check
      _
    $region3: #{tpu_custom_call.1} parent=1 // pred_check_branch
      %14 = sbr.rel (0) target = $region5
    $region4: #{tpu_custom_call.1} parent=1 // pred_region
      _
    $region5: #{tpu_custom_call.1} parent=1 // pred_fallthru
      _
    // Predicated region
    $region6: #{tpu_custom_call.1} parent=1 // pred_check
      _
    $region7: #{tpu_custom_call.1} parent=1 // pred_check_branch
      %16 = sbr.rel (0) target = $region9
    $region8: #{tpu_custom_call.1} parent=1 // pred_region
      _
    $region9: #{tpu_custom_call.1} parent=1 // pred_fallthru
      _
    // Predicated region
    $region10: #{tpu_custom_call.1} parent=1 // pred_check
      _
    $region11: #{tpu_custom_call.1} parent=1 // pred_check_branch
      %18 = sbr.rel (0) target = $region13
    $region12: #{tpu_custom_call.1} parent=1 // pred_region
      _
    $region13: #{tpu_custom_call.1} parent=1 // pred_fallthru
      _
    // Predicated region
    $region14: #{tpu_custom_call.1} parent=1 // pred_check
      _
    $region15: #{tpu_custom_call.1} parent=1 // pred_check_branch
      %20 = sbr.rel (0) target = $region17
    $region16: #{tpu_custom_call.1} parent=1 // pred_region
      _
    $region17: #{tpu_custom_call.1} parent=1 // pred_fallthru
      _
    // Predicated region
    $region18: #{tpu_custom_call.1} parent=1 // pred_check
      _
    $region19: #{tpu_custom_call.1} parent=1 // pred_check_branch
      %22 = sbr.rel (0) target = $region21
    $region20: #{tpu_custom_call.1} parent=1 // pred_region
      _
    $region21: #{tpu_custom_call.1} parent=1 // pred_fallthru
      _
    // Predicated region
    $region22: #{tpu_custom_call.1} parent=1 // pred_check
      _
    $region23: #{tpu_custom_call.1} parent=1 // pred_check_branch
      %24 = sbr.rel (0) target = $region25
    $region24: #{tpu_custom_call.1} parent=1 // pred_region
      %s26 = ssub.s32 1152, 1152
      %27 = vsyncadd [#allocation5], %s26
      %s28 = sshll.u32 [#allocation4], 4
      %s29 = int_to_ptr.vmem [resolvable:$true] %s28
      %34 = dma.hbm_to_vmem [thread:$0]  %s5, 1152, %s29, [#allocation5], 64, 64, 4
    $region25: #{tpu_custom_call.1} parent=1 // pred_fallthru
      _
    // Predicated region
    $region26: #{tpu_custom_call.1} parent=1 // pred_check
      _
    $region27: #{tpu_custom_call.1} parent=1 // pred_check_branch
      %36 = sbr.rel (0) target = $region29
    $region28: #{tpu_custom_call.1} parent=1 // pred_region
      %37 = dma.done [#allocation5], 1152
    $region29: #{tpu_custom_call.1} parent=1 // pred_fallthru
      _
    %p39 = scmp.eq.s32.totalorder 0, 0
    // Predicated region
    $region30: #{tpu_custom_call.1} parent=1 // pred_check
      %p40 = pneg %p39
    $region31: #{tpu_custom_call.1} parent=1 // pred_check_branch
      %42 = sbr.rel (%p40) target = $region33
    $region32: #{tpu_custom_call.1} parent=1 // pred_region
      %43 = vst [vmem:[#allocation2] sm:$0xff] 0.0
      %44 = vst [vmem:[#allocation2 + $0x8] sm:$0xff] 0.0
      %vm45 = vcmask 293888
      %46 = vst.msk [vmem:[#allocation2 + $0x10] sm:$0xff] %vm45, 0.0
      %47 = vst [vmem:[#allocation3] sm:$0xff] 0.0
      %48 = vst [vmem:[#allocation3 + $0x8] sm:$0xff] 0.0
      %49 = vst.msk [vmem:[#allocation3 + $0x10] sm:$0xff] %vm45, 0.0
    $region33: #{tpu_custom_call.1} parent=1 // pred_fallthru
      _
    %v50 = vld [vmem:[%s0] sm:$0xf]
    %52 = vrot.lane.b32.xlu0 %v50, 9
    %v53 = vpop.permute.xlu0 %52
    %vm55 = vcmask 1043528
    %56 = vst.msk [vmem:[#allocation2] sm:$0xf] %vm55, %v53
    %vm57 = vcmask 68608
    %58 = vst.msk [vmem:[#allocation2 + $0x8] sm:$0xf] %vm57, %v53
    %s59 = scalar_lea.vmem %s0, 4
    %v60 = vld [vmem:[%s59] sm:$0xf]
    %62 = vrot.lane.b32.xlu0 %v60, 27
    %v63 = vpop.permute.xlu0 %62
    %vm65 = vcmask 1043672
    %66 = vst.msk [vmem:[#allocation2 + $0x8] sm:$0xf] %vm65, %v63
    %vm67 = vcmask 216064
    %68 = vst.msk [vmem:[#allocation2 + $0x10] sm:$0xf] %vm67, %v63
    %v69 = vld [vmem:[#allocation2] sm:$0xff]
    %v70 = vpack.c.bf16 %v69, %v69
    %v71 = vld [vmem:[#allocation2 + $0x8] sm:$0xff]
    %v72 = vld [vmem:[#allocation2 + $0x10] sm:$0xff]
    %v73 = vpack.c.bf16 %v71, %v71
    %v74 = vpack.c.bf16 %v72, %v72
    %77 = vrot.lane.b32.xlu0 %v73, 110
    %v78 = vpop.permute.xlu0 %77
    %79 = vrot.lane.b32.xlu0 %v74, 110
    %v80 = vpop.permute.xlu0 %79
    %vm81 = vcmask 900096
    %v82 = vsel %vm81, %v78, %v80
    %84 = vrot.lane.b32.xlu0 %v70, 125
    %v85 = vpop.permute.xlu0 %84
    %86 = vrot.lane.b32.xlu0 %v73, 125
    %v87 = vpop.permute.xlu0 %86
    %vm88 = vcmask 1022976
    %v89 = vsel %vm88, %v85, %v87
    %90 = vrot.lane.b32.xlu0 %v73, 107
    %v91 = vpop.permute.xlu0 %90
    %92 = vrot.lane.b32.xlu0 %v74, 107
    %v93 = vpop.permute.xlu0 %92
    %vm94 = vcmask 875520
    %v95 = vsel %vm94, %v91, %v93
    %96 = vrot.lane.b32.xlu0 %v70, 123
    %v97 = vpop.permute.xlu0 %96
    %98 = vrot.lane.b32.xlu0 %v73, 123
    %v99 = vpop.permute.xlu0 %98
    %vm100 = vcmask 1006592
    %v101 = vsel %vm100, %v97, %v99
    %102 = vrot.lane.b32.xlu0 %v73, 105
    %v103 = vpop.permute.xlu0 %102
    %104 = vrot.lane.b32.xlu0 %v74, 105
    %v105 = vpop.permute.xlu0 %104
    %vm106 = vcmask 859136
    %v107 = vsel %vm106, %v103, %v105
    %108 = vrot.lane.b32.xlu0 %v70, 122
    %v109 = vpop.permute.xlu0 %108
    %110 = vrot.lane.b32.xlu0 %v73, 122
    %v111 = vpop.permute.xlu0 %110
    %vm112 = vcmask 998400
    %v113 = vsel %vm112, %v109, %v111
    %114 = vrot.lane.b32.xlu0 %v73, 104
    %v115 = vpop.permute.xlu0 %114
    %116 = vrot.lane.b32.xlu0 %v74, 104
    %v117 = vpop.permute.xlu0 %116
    %vm118 = vcmask 850944
    %v119 = vsel %vm118, %v115, %v117
    %120 = vrot.lane.b32.xlu0 %v70, 121
    %v121 = vpop.permute.xlu0 %120
    %122 = vrot.lane.b32.xlu0 %v73, 121
    %v123 = vpop.permute.xlu0 %122
    %vm124 = vcmask 990208
    %v125 = vsel %vm124, %v121, %v123
    %126 = vrot.lane.b32.xlu0 %v73, 103
    %v127 = vpop.permute.xlu0 %126
    %128 = vrot.lane.b32.xlu0 %v74, 103
    %v129 = vpop.permute.xlu0 %128
    %vm130 = vcmask 842752
    %v131 = vsel %vm130, %v127, %v129
    %132 = vrot.lane.b32.xlu0 %v70, 120
    %v133 = vpop.permute.xlu0 %132
    %134 = vrot.lane.b32.xlu0 %v73, 120
    %v135 = vpop.permute.xlu0 %134
    %vm136 = vcmask 982016
    %v137 = vsel %vm136, %v133, %v135
    %138 = vrot.lane.b32.xlu0 %v73, 102
    %v139 = vpop.permute.xlu0 %138
    %140 = vrot.lane.b32.xlu0 %v74, 102
    %v141 = vpop.permute.xlu0 %140
    %vm142 = vcmask 834560
    %v143 = vsel %vm142, %v139, %v141
    %144 = vrot.lane.b32.xlu0 %v70, 119
    %v145 = vpop.permute.xlu0 %144
    %146 = vrot.lane.b32.xlu0 %v73, 119
    %v147 = vpop.permute.xlu0 %146
    %vm148 = vcmask 973824
    %v149 = vsel %vm148, %v145, %v147
    %150 = vrot.lane.b32.xlu0 %v73, 101
    %v151 = vpop.permute.xlu0 %150
    %152 = vrot.lane.b32.xlu0 %v74, 101
    %v153 = vpop.permute.xlu0 %152
    %vm154 = vcmask 826368
    %v155 = vsel %vm154, %v151, %v153
    %156 = vrot.lane.b32.xlu0 %v70, 118
    %v157 = vpop.permute.xlu0 %156
    %158 = vrot.lane.b32.xlu0 %v73, 118
    %v159 = vpop.permute.xlu0 %158
    %vm160 = vcmask 965632
    %v161 = vsel %vm160, %v157, %v159
    %162 = vrot.lane.b32.xlu0 %v73, 100
    %v163 = vpop.permute.xlu0 %162
    %164 = vrot.lane.b32.xlu0 %v74, 100
    %v165 = vpop.permute.xlu0 %164
    %vm166 = vcmask 818176
    %v167 = vsel %vm166, %v163, %v165
    %168 = vrot.lane.b32.xlu0 %v70, 117
    %v169 = vpop.permute.xlu0 %168
    %170 = vrot.lane.b32.xlu0 %v73, 117
    %v171 = vpop.permute.xlu0 %170
    %vm172 = vcmask 957440
    %v173 = vsel %vm172, %v169, %v171
    %174 = vrot.lane.b32.xlu0 %v73, 99
    %v175 = vpop.permute.xlu0 %174
    %176 = vrot.lane.b32.xlu0 %v74, 99
    %v177 = vpop.permute.xlu0 %176
    %vm178 = vcmask 809984
    %v179 = vsel %vm178, %v175, %v177
    %180 = vrot.lane.b32.xlu0 %v70, 116
    %v181 = vpop.permute.xlu0 %180
    %182 = vrot.lane.b32.xlu0 %v73, 116
    %v183 = vpop.permute.xlu0 %182
    %vm184 = vcmask 949248
    %v185 = vsel %vm184, %v181, %v183
    %186 = vrot.lane.b32.xlu0 %v73, 98
    %v187 = vpop.permute.xlu0 %186
    %188 = vrot.lane.b32.xlu0 %v74, 98
    %v189 = vpop.permute.xlu0 %188
    %vm190 = vcmask 801792
    %v191 = vsel %vm190, %v187, %v189
    %192 = vrot.lane.b32.xlu0 %v70, 115
    %v193 = vpop.permute.xlu0 %192
    %194 = vrot.lane.b32.xlu0 %v73, 115
    %v195 = vpop.permute.xlu0 %194
    %vm196 = vcmask 941056
    %v197 = vsel %vm196, %v193, %v195
    %198 = vrot.lane.b32.xlu0 %v73, 97
    %v199 = vpop.permute.xlu0 %198
    %200 = vrot.lane.b32.xlu0 %v74, 97
    %v201 = vpop.permute.xlu0 %200
    %vm202 = vcmask 793600
    %v203 = vsel %vm202, %v199, %v201
    %204 = vrot.lane.b32.xlu0 %v70, 113
    %v205 = vpop.permute.xlu0 %204
    %206 = vrot.lane.b32.xlu0 %v73, 113
    %v207 = vpop.permute.xlu0 %206
    %vm208 = vcmask 924672
    %v209 = vsel %vm208, %v205, %v207
    %210 = vrot.lane.b32.xlu0 %v73, 95
    %v211 = vpop.permute.xlu0 %210
    %212 = vrot.lane.b32.xlu0 %v74, 95
    %v213 = vpop.permute.xlu0 %212
    %vm214 = vcmask 777216
    %v215 = vsel %vm214, %v211, %v213
    %216 = vrot.lane.b32.xlu0 %v70, 110
    %v217 = vpop.permute.xlu0 %216
    %v218 = vsel %vm81, %v217, %v78
    %219 = vrot.lane.b32.xlu0 %v73, 92
    %v220 = vpop.permute.xlu0 %219
    %221 = vrot.lane.b32.xlu0 %v74, 92
    %v222 = vpop.permute.xlu0 %221
    %vm223 = vcmask 752640
    %v224 = vsel %vm223, %v220, %v222
    %v225 = vrot.slane %v89, 4
    %v226 = vrot.slane %v95, 4
    %v227 = vrot.slane %v113, 4
    %v228 = vrot.slane %v119, 4
    %v229 = vrot.slane %v137, 4
    %v230 = vrot.slane %v143, 4
    %v231 = vrot.slane %v161, 4
    %v232 = vrot.slane %v167, 4
    %v233 = vrot.slane %v185, 4
    %v234 = vrot.slane %v191, 4
    %v235 = vrot.slane %v209, 4
    %v236 = vrot.slane %v215, 4
    %vm237 = vcmask 1043456
    %v240 = vsel %vm237, %v70, %v225
    %v244 = vsel %vm237, %v82, %v226
    %v248 = vsel %vm237, %v101, %v227
    %v252 = vsel %vm237, %v107, %v228
    %v256 = vsel %vm237, %v125, %v229
    %v260 = vsel %vm237, %v131, %v230
    %v264 = vsel %vm237, %v149, %v231
    %v268 = vsel %vm237, %v155, %v232
    %v272 = vsel %vm237, %v173, %v233
    %v276 = vsel %vm237, %v179, %v234
    %v280 = vsel %vm237, %v197, %v235
    %v284 = vsel %vm237, %v203, %v236
    %v286 = vld [vmem:[%s1] sm:$0xf]
    %v287 = vld [vmem:[%s1 + $0x4] sm:$0xf]
    %v288 = vld [vmem:[%s1 + $0x8] sm:$0xf]
    %v289 = vld [vmem:[%s2] sm:$0xff]
    %v290 = vld [vmem:[%s2 + $0x8] sm:$0xff]
    %v291 = vld [vmem:[%s2 + $0x10] sm:$0xff]
    %293 = vset.pattern.permute.xlu0 0
    %294 = vperm.xlu0 %293, %v289
    %v295 = vpop.permute.xlu0 %294
    %298 = vset.pattern.permute.xlu0 0
    %299 = vperm.xlu0 %298, %v290
    %v300 = vpop.permute.xlu0 %299
    %303 = vset.pattern.permute.xlu0 0
    %304 = vperm.xlu0 %303, %v291
    %v305 = vpop.permute.xlu0 %304
    %v310 = vunpack.c.l.b16 %v286
    %v311 = vunpack.c.l.b16 %v287
    %v312 = vunpack.c.l.b16 %v288
    %v313 = vpack.c.b16 %v311, %v310
    %v314 = vpack.c.b16 %v312, %v312
    %vm315 = vcmask 850944
    %v317 = vsel %vm315, %v313, 0
    %v320 = vsel %vm315, %v314, 0
    %v323 = vsel %vm237, %v218, 0
    %v326 = vsel %vm237, %v224, 0
    %328 = vmatprep.subr.bf16.mxu0 0
    %329 = vmatpush1.bf16.msra.mxu0 0
    %330 = vmatprep.subr.bf16.mxu0 %v326
    %331 = vmatpush1.bf16.msra.mxu0 %v323
    %332 = vmatprep.subr.bf16.mxu0 %v284
    %333 = vmatpush1.bf16.msra.mxu0 %v280
    %334 = vmatprep.subr.bf16.mxu0 %v276
    %335 = vmatpush1.bf16.msra.mxu0 %v272
    %336 = vmatprep.subr.bf16.mxu0 %v268
    %337 = vmatpush1.bf16.msra.mxu0 %v264
    %338 = vmatprep.subr.bf16.mxu0 %v260
    %339 = vmatpush1.bf16.msra.mxu0 %v256
    %340 = vmatprep.subr.bf16.mxu0 %v252
    %341 = vmatpush1.bf16.msra.mxu0 %v248
    %342 = vmatprep.subr.bf16.mxu0 %v244
    %343 = vmatpush1.bf16.msra.mxu0 %v240
    %344 = vmatprep.subr.bf16.mxu0 0
    %345 = vmatpush2.bf16.msra.mxu0 0
    %346 = vmatprep.subr.bf16.mxu0 0
    %347 = vmatpush2.bf16.msra.mxu0 0
    %348 = vmatprep.subr.bf16.mxu0 0
    %349 = vmatpush2.bf16.msra.mxu0 0
    %350 = vmatprep.subr.bf16.mxu0 0
    %351 = vmatpush2.bf16.msra.mxu0 0
    %352 = vmatprep.subr.bf16.mxu0 0
    %353 = vmatpush2.bf16.msra.mxu0 0
    %354 = vmatprep.subr.bf16.mxu0 0
    %355 = vmatpush2.bf16.msra.mxu0 0
    %356 = vmatprep.subr.bf16.mxu0 0
    %357 = vmatpush2.bf16.msra.mxu0 0
    %358 = vmatprep.subr.bf16.mxu0 0
    %359 = vmatpush2.bf16.msra.mxu0 0
    %360 = vmatprep.mubr.bf16.mxu0 0
    %361 = vmatmul.mubr.bf16.gmra.mxu0 %v317
    %v362 = vpop.f32.mrf.mxu0
    %v363 = vadd.f32 %v295, %v362
    %v364 = vpop.f32.mrf.mxu0
    %v365 = vadd.f32 %v295, %v364
    %v366 = vpop.f32.mrf.mxu0
    %v367 = vadd.f32 %v300, %v366
    %v368 = vpop.f32.mrf.mxu0
    %v369 = vadd.f32 %v300, %v368
    %370 = vmatprep.mubr.bf16.mxu0 0
    %371 = vmatmul.mubr.bf16.gmra.mxu0 %v320
    %v372 = vpop.f32.mrf.mxu0
    %v373 = vadd.f32 %v305, %v372
    %v374 = vpop.f32.mrf.mxu0
    %v375 = vadd.f32 %v305, %v374
    %v376 = vpop.f32.mrf.mxu0
    %v377 = vpop.f32.mrf.mxu0
    %378 = vdwg.mxu0
    %vm379 = vcmp.ge.f32.partialorder %v363, 0.0
    %vm380 = vcmp.ge.f32.partialorder %v365, 0.0
    %vm381 = vcmp.ge.f32.partialorder %v367, 0.0
    %vm382 = vcmp.ge.f32.partialorder %v369, 0.0
    %vm383 = vcmp.ge.f32.partialorder %v373, 0.0
    %vm384 = vcmp.ge.f32.partialorder %v375, 0.0
    %v385 = vmul.f32 %v363, 0.2
    %v386 = vmul.f32 %v365, 0.2
    %v387 = vmul.f32 %v367, 0.2
    %v388 = vmul.f32 %v369, 0.2
    %v389 = vmul.f32 %v373, 0.2
    %v390 = vmul.f32 %v375, 0.2
    %v391 = vsel %vm379, %v363, %v385
    %v392 = vsel %vm380, %v365, %v386
    %v393 = vsel %vm381, %v367, %v387
    %v394 = vsel %vm382, %v369, %v388
    %v395 = vsel %vm383, %v373, %v389
    %v396 = vsel %vm384, %v375, %v390
    %v397 = vadd.f32 %v391, %v393
    %v398 = vadd.f32 %v392, %v394
    %v399 = vadd.f32 %v397, %v395
    %v400 = vadd.f32 %v398, %v396
    %402 = vrot.lane.b32.xlu0 %v399, 9
    %v403 = vpop.permute.xlu0 %402
    %vm405 = vcmask 1047624
    %406 = vst.msk [vmem:[#allocation3] sm:$0xff] %vm405, %v403
    %vm407 = vcmask 72704
    %408 = vst.msk [vmem:[#allocation3 + $0x8] sm:$0xff] %vm407, %v403
    %410 = vrot.lane.b32.xlu0 %v400, 27
    %v411 = vpop.permute.xlu0 %410
    %vm413 = vcmask 1047768
    %414 = vst.msk [vmem:[#allocation3 + $0x8] sm:$0xff] %vm413, %v411
    %vm415 = vcmask 220160
    %416 = vst.msk [vmem:[#allocation3 + $0x10] sm:$0xff] %vm415, %v411
    %v417 = vld [vmem:[#allocation3] sm:$0xff]
    %v418 = vld [vmem:[#allocation3 + $0x8] sm:$0xff]
    %v419 = vpack.c.bf16 %v417, %v417
    %v420 = vpack.c.bf16 %v418, %v418
    %v421 = vld [vmem:[#allocation3 + $0x10] sm:$0xff]
    %v422 = vpack.c.bf16 %v421, %v421
    %425 = vrot.lane.b32.xlu0 %v420, 126
    %v426 = vpop.permute.xlu0 %425
    %427 = vrot.lane.b32.xlu0 %v422, 126
    %v428 = vpop.permute.xlu0 %427
    %vm429 = vcmask 1031168
    %v430 = vsel %vm429, %v426, %v428
    %vm431 = vcmask 130048
    %v434 = vsel %vm431, %v420, %v430
    %436 = vrot.lane.b32.xlu0 %v419, 127
    %v437 = vpop.permute.xlu0 %436
    %438 = vrot.lane.b32.xlu0 %v420, 127
    %v439 = vpop.permute.xlu0 %438
    %vm440 = vcmask 1039360
    %v441 = vsel %vm440, %v437, %v439
    %442 = vrot.lane.b32.xlu0 %v420, 125
    %v443 = vpop.permute.xlu0 %442
    %444 = vrot.lane.b32.xlu0 %v422, 125
    %v445 = vpop.permute.xlu0 %444
    %v446 = vsel %vm88, %v443, %v445
    %v449 = vsel %vm431, %v439, %v446
    %450 = vrot.lane.b32.xlu0 %v419, 126
    %v451 = vpop.permute.xlu0 %450
    %v452 = vsel %vm429, %v451, %v426
    %453 = vrot.lane.b32.xlu0 %v420, 124
    %v454 = vpop.permute.xlu0 %453
    %455 = vrot.lane.b32.xlu0 %v422, 124
    %v456 = vpop.permute.xlu0 %455
    %vm457 = vcmask 1014784
    %v458 = vsel %vm457, %v454, %v456
    %v461 = vsel %vm431, %v426, %v458
    %v463 = vrot.slane %v441, 4
    %v464 = vrot.slane %v449, 4
    %v465 = vrot.slane %v445, 4
    %v468 = vsel %vm237, %v419, %v463
    %v471 = vsel %vm237, %v434, %v464
    %v475 = vsel %vm237, %v428, %v465
    %v477 = vld [vmem:[%s3] sm:$0xf]
    %vm478 = vcmask 195584
    %v480 = vsel %vm478, %v477, 0
    %v483 = vsel %vm237, %v452, 0
    %v485 = vsel %vm237, %v461, 0
    %v488 = vsel %vm237, %v456, 0
    %490 = vmatprep.subr.bf16.mxu0 0
    %491 = vmatpush1.bf16.msra.mxu0 0
    %492 = vmatprep.subr.bf16.mxu0 0
    %493 = vmatpush1.bf16.msra.mxu0 0
    %494 = vmatprep.subr.bf16.mxu0 0
    %495 = vmatpush1.bf16.msra.mxu0 0
    %496 = vmatprep.subr.bf16.mxu0 0
    %497 = vmatpush1.bf16.msra.mxu0 0
    %498 = vmatprep.subr.bf16.mxu0 0
    %499 = vmatpush1.bf16.msra.mxu0 0
    %500 = vmatprep.subr.bf16.mxu0 0
    %501 = vmatpush1.bf16.msra.mxu0 0
    %502 = vmatprep.subr.bf16.mxu0 %v485
    %503 = vmatpush1.bf16.msra.mxu0 %v483
    %504 = vmatprep.subr.bf16.mxu0 %v471
    %505 = vmatpush1.bf16.msra.mxu0 %v468
    %506 = vmatprep.subr.bf16.mxu0 0
    %507 = vmatpush2.bf16.msra.mxu0 0
    %508 = vmatprep.subr.bf16.mxu0 0
    %509 = vmatpush2.bf16.msra.mxu0 0
    %510 = vmatprep.subr.bf16.mxu0 0
    %511 = vmatpush2.bf16.msra.mxu0 0
    %512 = vmatprep.subr.bf16.mxu0 0
    %513 = vmatpush2.bf16.msra.mxu0 0
    %514 = vmatprep.subr.bf16.mxu0 0
    %515 = vmatpush2.bf16.msra.mxu0 0
    %516 = vmatprep.subr.bf16.mxu0 0
    %517 = vmatpush2.bf16.msra.mxu0 0
    %518 = vmatprep.subr.bf16.mxu0 0
    %519 = vmatpush2.bf16.msra.mxu0 0
    %520 = vmatprep.subr.bf16.mxu0 0
    %521 = vmatpush2.bf16.msra.mxu0 0
    %522 = vmatprep.mubr.bf16.mxu0 0
    %523 = vmatmul.mubr.bf16.gmra.mxu0 %v480
    %v524 = vpop.f32.mrf.mxu0
    %v525 = vadd.f32 0.0, %v524
    %v526 = vpop.f32.mrf.mxu0
    %v527 = vadd.f32 0.0, %v526
    %v528 = vpop.f32.mrf.mxu0
    %v529 = vpop.f32.mrf.mxu0
    %530 = vdwg.mxu0
    %531 = vmatprep.subr.bf16.mxu0 0
    %532 = vmatpush1.bf16.msra.mxu0 0
    %533 = vmatprep.subr.bf16.mxu0 0
    %534 = vmatpush1.bf16.msra.mxu0 0
    %535 = vmatprep.subr.bf16.mxu0 0
    %536 = vmatpush1.bf16.msra.mxu0 0
    %537 = vmatprep.subr.bf16.mxu0 0
    %538 = vmatpush1.bf16.msra.mxu0 0
    %539 = vmatprep.subr.bf16.mxu0 0
    %540 = vmatpush1.bf16.msra.mxu0 0
    %541 = vmatprep.subr.bf16.mxu0 0
    %542 = vmatpush1.bf16.msra.mxu0 0
    %543 = vmatprep.subr.bf16.mxu0 0
    %544 = vmatpush1.bf16.msra.mxu0 %v488
    %545 = vmatprep.subr.bf16.mxu0 0
    %546 = vmatpush1.bf16.msra.mxu0 %v475
    %547 = vmatprep.subr.bf16.mxu0 0
    %548 = vmatpush2.bf16.msra.mxu0 0
    %549 = vmatprep.subr.bf16.mxu0 0
    %550 = vmatpush2.bf16.msra.mxu0 0
    %551 = vmatprep.subr.bf16.mxu0 0
    %552 = vmatpush2.bf16.msra.mxu0 0
    %553 = vmatprep.subr.bf16.mxu0 0
    %554 = vmatpush2.bf16.msra.mxu0 0
    %555 = vmatprep.subr.bf16.mxu0 0
    %556 = vmatpush2.bf16.msra.mxu0 0
    %557 = vmatprep.subr.bf16.mxu0 0
    %558 = vmatpush2.bf16.msra.mxu0 0
    %559 = vmatprep.subr.bf16.mxu0 0
    %560 = vmatpush2.bf16.msra.mxu0 0
    %561 = vmatprep.subr.bf16.mxu0 0
    %562 = vmatpush2.bf16.msra.mxu0 0
    %563 = vmatprep.mubr.bf16.mxu0 0
    %564 = vmatmul.mubr.bf16.gmra.mxu0 %v480
    %v565 = vpop.f32.mrf.mxu0
    %v566 = vadd.f32 0.0, %v565
    %v567 = vpop.f32.mrf.mxu0
    %v568 = vpop.f32.mrf.mxu0
    %v569 = vpop.f32.mrf.mxu0
    %570 = vdwg.mxu0
    %v571 = vld [vmem:[#allocation4] sm:$0xf]
    %v572 = vld [vmem:[#allocation4 + $0x4] sm:$0xf]
    %v573 = vld [vmem:[#allocation4 + $0x8] sm:$0xf]
    %v574 = vld [vmem:[#allocation4 + $0xc] sm:$0xf]
    %v575 = vld [vmem:[#allocation4 + $0x10] sm:$0xf]
    %v576 = vld [vmem:[#allocation4 + $0x14] sm:$0xf]
    %v577 = vld [vmem:[#allocation4 + $0x18] sm:$0xf]
    %v578 = vld [vmem:[#allocation4 + $0x1c] sm:$0xf]
    %v579 = vld [vmem:[#allocation4 + $0x20] sm:$0xf]
    %v580 = vld [vmem:[#allocation4 + $0x24] sm:$0xf]
    %v581 = vld [vmem:[#allocation4 + $0x28] sm:$0xf]
    %v582 = vld [vmem:[#allocation4 + $0x2c] sm:$0xf]
    %v583 = vld [vmem:[#allocation4 + $0x30] sm:$0xf]
    %v584 = vld [vmem:[#allocation4 + $0x34] sm:$0xf]
    %v585 = vld [vmem:[#allocation4 + $0x38] sm:$0xf]
    %v586 = vld [vmem:[#allocation4 + $0x3c] sm:$0xf]
    %v587 = vld [vmem:[#allocation4 + $0x40] sm:$0xf]
    %v588 = vld [vmem:[#allocation4 + $0x44] sm:$0xf]
    %v589 = vpack.c.bf16 %v525, %v525
    %v590 = vpack.c.bf16 %v527, %v527
    %v591 = vld [vmem:[%s4] sm:$0xff]
    %593 = vset.pattern.permute.xlu0 0
    %594 = vperm.xlu0 %593, %v591
    %v595 = vpop.permute.xlu0 %594
    %v615 = vunpack.c.l.b16 %v571
    %v616 = vunpack.c.l.b16 %v572
    %v617 = vunpack.c.l.b16 %v573
    %v618 = vunpack.c.l.b16 %v574
    %v619 = vunpack.c.l.b16 %v575
    %v620 = vunpack.c.l.b16 %v576
    %v621 = vunpack.c.l.b16 %v577
    %v622 = vunpack.c.l.b16 %v578
    %v623 = vunpack.c.l.b16 %v579
    %v624 = vunpack.c.l.b16 %v580
    %v625 = vunpack.c.l.b16 %v581
    %v626 = vunpack.c.l.b16 %v582
    %v627 = vunpack.c.l.b16 %v583
    %v628 = vunpack.c.l.b16 %v584
    %v629 = vunpack.c.l.b16 %v585
    %v630 = vunpack.c.l.b16 %v586
    %v631 = vunpack.c.l.b16 %v587
    %v632 = vunpack.c.l.b16 %v588
    %v633 = vpack.c.b16 %v616, %v615
    %v634 = vpack.c.b16 %v618, %v617
    %v635 = vpack.c.b16 %v620, %v619
    %v636 = vpack.c.b16 %v622, %v621
    %v637 = vpack.c.b16 %v624, %v623
    %v638 = vpack.c.b16 %v626, %v625
    %v639 = vpack.c.b16 %v628, %v627
    %v640 = vpack.c.b16 %v630, %v629
    %v641 = vpack.c.b16 %v632, %v631
    %v652 = vsel %vm431, %v590, 0
    %654 = vmatprep.subr.bf16.mxu0 0
    %655 = vmatpush1.bf16.msra.mxu0 %v640
    %656 = vmatprep.subr.bf16.mxu0 0
    %657 = vmatpush1.bf16.msra.mxu0 %v639
    %658 = vmatprep.subr.bf16.mxu0 0
    %659 = vmatpush1.bf16.msra.mxu0 %v638
    %660 = vmatprep.subr.bf16.mxu0 0
    %661 = vmatpush1.bf16.msra.mxu0 %v637
    %662 = vmatprep.subr.bf16.mxu0 0
    %663 = vmatpush1.bf16.msra.mxu0 %v636
    %664 = vmatprep.subr.bf16.mxu0 0
    %665 = vmatpush1.bf16.msra.mxu0 %v635
    %666 = vmatprep.subr.bf16.mxu0 0
    %667 = vmatpush1.bf16.msra.mxu0 %v634
    %668 = vmatprep.subr.bf16.mxu0 0
    %669 = vmatpush1.bf16.msra.mxu0 %v633
    %670 = vmatprep.subr.bf16.mxu0 0
    %671 = vmatpush2.bf16.msra.mxu0 0
    %672 = vmatprep.subr.bf16.mxu0 0
    %673 = vmatpush2.bf16.msra.mxu0 0
    %674 = vmatprep.subr.bf16.mxu0 0
    %675 = vmatpush2.bf16.msra.mxu0 0
    %676 = vmatprep.subr.bf16.mxu0 0
    %677 = vmatpush2.bf16.msra.mxu0 0
    %678 = vmatprep.subr.bf16.mxu0 0
    %679 = vmatpush2.bf16.msra.mxu0 0
    %680 = vmatprep.subr.bf16.mxu0 0
    %681 = vmatpush2.bf16.msra.mxu0 0
    %682 = vmatprep.subr.bf16.mxu0 0
    %683 = vmatpush2.bf16.msra.mxu0 0
    %684 = vmatprep.subr.bf16.mxu0 0
    %685 = vmatpush2.bf16.msra.mxu0 %v641
    %686 = vmatprep.mubr.bf16.mxu0 %v652
    %687 = vmatmul.mubr.bf16.gmra.mxu0 %v589
    %v688 = vpop.f32.mrf.mxu0
    %v689 = vadd.f32 %v595, %v688
    %v690 = vpop.f32.mrf.mxu0
    %v691 = vpop.f32.mrf.mxu0
    %v692 = vpop.f32.mrf.mxu0
    %693 = vdwg.mxu0
    %vm694 = vcmp.ge.f32.partialorder %v689, 0.0
    %v695 = vmul.f32 %v689, 0.2
    %v696 = vsel %vm694, %v689, %v695
    %697 = vst [vmem:[#allocation7] sm:$0xff] %v696
    %v698 = vpack.c.bf16 %v566, %v566
    %v699 = vld [vmem:[%s4] sm:$0xff]
    %701 = vset.pattern.permute.xlu0 0
    %702 = vperm.xlu0 %701, %v699
    %v703 = vpop.permute.xlu0 %702
    %707 = vrot.lane.b32.xlu0 %v590, 112
    %v708 = vpop.permute.xlu0 %707
    %709 = vrot.lane.b32.xlu0 %v698, 112
    %v710 = vpop.permute.xlu0 %709
    %vm711 = vcmask 916480
    %v712 = vsel %vm711, %v708, %v710
    %v715 = vsel %vm431, %v710, 0
    %717 = vmatprep.subr.bf16.mxu0 0
    %718 = vmatpush1.bf16.msra.mxu0 %v640
    %719 = vmatprep.subr.bf16.mxu0 0
    %720 = vmatpush1.bf16.msra.mxu0 %v639
    %721 = vmatprep.subr.bf16.mxu0 0
    %722 = vmatpush1.bf16.msra.mxu0 %v638
    %723 = vmatprep.subr.bf16.mxu0 0
    %724 = vmatpush1.bf16.msra.mxu0 %v637
    %725 = vmatprep.subr.bf16.mxu0 0
    %726 = vmatpush1.bf16.msra.mxu0 %v636
    %727 = vmatprep.subr.bf16.mxu0 0
    %728 = vmatpush1.bf16.msra.mxu0 %v635
    %729 = vmatprep.subr.bf16.mxu0 0
    %730 = vmatpush1.bf16.msra.mxu0 %v634
    %731 = vmatprep.subr.bf16.mxu0 0
    %732 = vmatpush1.bf16.msra.mxu0 %v633
    %733 = vmatprep.subr.bf16.mxu0 0
    %734 = vmatpush2.bf16.msra.mxu0 0
    %735 = vmatprep.subr.bf16.mxu0 0
    %736 = vmatpush2.bf16.msra.mxu0 0
    %737 = vmatprep.subr.bf16.mxu0 0
    %738 = vmatpush2.bf16.msra.mxu0 0
    %739 = vmatprep.subr.bf16.mxu0 0
    %740 = vmatpush2.bf16.msra.mxu0 0
    %741 = vmatprep.subr.bf16.mxu0 0
    %742 = vmatpush2.bf16.msra.mxu0 0
    %743 = vmatprep.subr.bf16.mxu0 0
    %744 = vmatpush2.bf16.msra.mxu0 0
    %745 = vmatprep.subr.bf16.mxu0 0
    %746 = vmatpush2.bf16.msra.mxu0 0
    %747 = vmatprep.subr.bf16.mxu0 0
    %748 = vmatpush2.bf16.msra.mxu0 %v641
    %749 = vmatprep.mubr.bf16.mxu0 %v715
    %750 = vmatmul.mubr.bf16.gmra.mxu0 %v712
    %v751 = vpop.f32.mrf.mxu0
    %v752 = vadd.f32 %v703, %v751
    %v753 = vpop.f32.mrf.mxu0
    %v754 = vpop.f32.mrf.mxu0
    %v755 = vpop.f32.mrf.mxu0
    %756 = vdwg.mxu0
    %vm757 = vcmp.ge.f32.partialorder %v752, 0.0
    %v758 = vmul.f32 %v752, 0.2
    %v759 = vsel %vm757, %v752, %v758
    %s760 = scalar_lea.vmem [#allocation7], 8
    %761 = vst [vmem:[%s760] sm:$0xff] %v759
    // Predicated region
    $region34: #{tpu_custom_call.1} parent=1 // pred_check
      _
    $region35: #{tpu_custom_call.1} parent=1 // pred_check_branch
      %763 = sbr.rel (0) target = $region37
    $region36: #{tpu_custom_call.1} parent=1 // pred_region
      %s765 = ssub.s32 256, 256
      %766 = vsyncadd [#allocation6], %s765
      %s767 = sshll.u32 [#allocation7], 4
      %s768 = int_to_ptr.vmem [resolvable:$true] %s767
      %773 = dma.vmem_to_hbm [thread:$0]  %s768, 256, %s6, [#allocation6], 128, 128, 8
    $region37: #{tpu_custom_call.1} parent=1 // pred_fallthru
      _
    // Predicated region
    $region38: #{tpu_custom_call.1} parent=1 // pred_check
      _
    $region39: #{tpu_custom_call.1} parent=1 // pred_check_branch
      %775 = sbr.rel (0) target = $region41
    $region40: #{tpu_custom_call.1} parent=1 // pred_region
      %776 = dma.done [#allocation6], 256
    $region41: #{tpu_custom_call.1} parent=1 // pred_fallthru
      _
    %777 = vsyncpa [#allocation5], 1
    %778 = vsyncpa [#allocation6], 1

</llo_original>
